<compile_context>
chip_gen: v6e
topology: v6e:2x2x1
jax: 0.10.0
libtpu: 0.0.40
codegen_flags: <defaults>
</compile_context>

<pallas_src>
import functools
import math

import numpy as np
import jax
import jax.numpy as jnp
from jax.experimental import pallas as pl
from jax.experimental.pallas import tpu as pltpu


PAD = 128           # lane-dense feature width; max flattened activation size of this model
IN_LANES = 16       # C_in * L_in of the model input (1 * 16)
OUT_C, OUT_L = 1, 16

# per-layer activations after fc1/fc2 were collapsed into a single "none" layer
_ACTS = ("relu", "relu", "relu", "none", "relu", "relu", "sigmoid")
N_LAYERS = len(_ACTS)


# ---------------------------------------------------------------------------
# Fused forward kernel: 7 chained  h = act(h @ W + b)  steps, all in VMEM/vregs
# ---------------------------------------------------------------------------
def _fused_ae_kernel(x_ref, *refs):
    # refs = (w0, b0, w1, b1, ..., w6, b6, o_ref)
    o_ref = refs[-1]
    h = x_ref[...].astype(jnp.bfloat16)                 # (TB, 16) carried in bf16
    for i, act in enumerate(_ACTS):
        w_ref = refs[2 * i]                             # (16,128) / (128,128) bf16, resident
        b_ref = refs[2 * i + 1]                         # (1, 128) f32, resident
        acc = jnp.dot(h, w_ref[...],
                      preferred_element_type=jnp.float32)   # MXU, f32 accumulate
        acc = acc + b_ref[...]                          # f32 VPU (safe on v5e)
        if act == "relu":
            acc = jnp.maximum(acc, 0.0)
        elif act == "sigmoid":
            acc = jax.nn.sigmoid(acc)                   # EUP, f32
        if i + 1 < N_LAYERS:
            h = acc.astype(jnp.bfloat16)                # bf16-carried intermediate
        else:
            h = acc                                     # final layer stays f32
    o_ref[...] = h.astype(o_ref.dtype)


def _num_tensorcores_per_chip():
    """2 on v7x (megacore sharding via 'parallel'), 1 on v5e/v6e."""
    try:
        kind = jax.devices()[0].device_kind.lower()
        if "v7" in kind:
            return 2
    except Exception:
        pass
    return 1


def _pick_batch_tile(B, block_batch):
    """Few, large grid steps (per-step overhead ~0.35us dominates on 1-TC chips);
    keep >=2 parallel steps when the chip has 2 TensorCores."""
    if block_batch is not None:
        tb = max(8, (int(block_batch) // 8) * 8)
        return tb
    b8 = ((B + 7) // 8) * 8
    n_tc = _num_tensorcores_per_chip()
    if n_tc >= 2 and b8 >= 16:
        tb = ((pl.cdiv(b8, n_tc) + 7) // 8) * 8
    else:
        tb = b8
    return min(512, tb)


@functools.partial(jax.jit, static_argnames=("block_batch",))
def conv_autoencoder_forward(prepared, x, block_batch=None):
    """x: (B, 1, 16) f32 NCL -> (B, 1, 16) f32, semantics of ConvAutoencoder.forward."""
    B, C_in, L_in = x.shape
    assert C_in * L_in == IN_LANES, (C_in, L_in)

    TB = _pick_batch_tile(B, block_batch)
    B_pad = ((B + TB - 1) // TB) * TB

    # Narrow (B_pad, 16) input slab: no 128-lane padding in the wrapper, 8x less input DMA.
    x_flat = x.reshape(B, IN_LANES).astype(jnp.float32)
    x_p = jnp.pad(x_flat, ((0, B_pad - B), (0, 0)))

    operands = [x_p]
    in_specs = [pl.BlockSpec((TB, IN_LANES), lambda i: (i, 0))]
    for li in range(N_LAYERS):
        w = prepared[f"w{li}"]
        operands += [w, prepared[f"b{li}"]]
        in_specs += [pl.BlockSpec(w.shape, lambda i: (0, 0)),     # weights resident in VMEM
                     pl.BlockSpec((1, PAD), lambda i: (0, 0))]    # bias resident in VMEM

    out = pl.pallas_call(
        _fused_ae_kernel,
        out_shape=jax.ShapeDtypeStruct((B_pad, PAD), jnp.float32),
        grid=(B_pad // TB,),
        in_specs=in_specs,
        out_specs=pl.BlockSpec((TB, PAD), lambda i: (i, 0)),
        compiler_params=pltpu.CompilerParams(
            dimension_semantics=("parallel",)),   # independent batch tiles; shards TCs on v7x
    )(*operands)

    # Final layer is ConvT1d(16,1,...): real output lives in the first 1*16 lanes.
    return out[:B, :OUT_C * OUT_L].reshape(B, OUT_C, OUT_L)


# ---------------------------------------------------------------------------
# One-time parameter preparation (hoisted out of the forward pass):
# every conv / conv-transpose is lowered to an exact dense (Toeplitz) matrix in matmul
# layout; fc1 & fc2 are algebraically collapsed into one 128x128 matrix (exact, no
# activation between them); weights stored bf16, biases f32.
# ---------------------------------------------------------------------------
def _conv1d_as_matrix(w, b, L_in, stride, padding):
    """w: (C_out, C_in, K) PyTorch Conv1d layout -> (C_in*L_in, C_out*L_out) matrix."""
    C_out, C_in, K = w.shape
    L_out = (L_in + 2 * padding - K) // stride + 1
    M = np.zeros((C_in * L_in, C_out * L_out), np.float32)
    for co in range(C_out):
        for lo in range(L_out):
            for ci in range(C_in):
                for k in range(K):
                    li = stride * lo + k - padding
                    if 0 <= li < L_in:
                        M[ci * L_in + li, co * L_out + lo] += w[co, ci, k]
    return M, np.repeat(b, L_out), L_out


def _convT1d_as_matrix(w, b, L_in, stride, padding, output_padding):
    """w: (C_in, C_out, K) PyTorch ConvTranspose1d layout -> dense matrix."""
    C_in, C_out, K = w.shape
    L_out = (L_in - 1) * stride - 2 * padding + K + output_padding
    M = np.zeros((C_in * L_in, C_out * L_out), np.float32)
    for ci in range(C_in):
        for li in range(L_in):
            for co in range(C_out):
                for k in range(K):
                    lo = li * stride + k - padding
                    if 0 <= lo < L_out:
                        M[ci * L_in + li, co * L_out + lo] += w[ci, co, k]
    return M, np.repeat(b, L_out), L_out


def prepare_params(params):
    """Convert PyTorch-layout params to padded, matmul-layout, bf16 kernel operands."""
    npp = {k: np.asarray(v, dtype=np.float32) for k, v in params.items()}

    mats = []
    L = 16
    for i in range(3):                                   # encoder convs
        M, bias, L = _conv1d_as_matrix(npp[f"enc{i}_w"], npp[f"enc{i}_b"], L,
                                       stride=2, padding=1)
        mats.append((M, bias))

    # fc1 + fc2 collapsed exactly (no activation between them in forward()):
    #   h @ W1 + b1 ; @ W2 + b2  ==  h @ (W1@W2) + (b1@W2 + b2)
    M1 = npp["fc1_w"].T.astype(np.float64)               # (128, latent)
    M2 = npp["fc2_w"].T.astype(np.float64)               # (latent, 128)
    M_fc = (M1 @ M2).astype(np.float32)
    b_fc = (npp["fc1_b"].astype(np.float64) @ M2
            + npp["fc2_b"].astype(np.float64)).astype(np.float32)
    mats.append((M_fc, b_fc))

    L = 2
    for i in range(3):                                   # decoder transposed convs
        M, bias, L = _convT1d_as_matrix(npp[f"dec{i}_w"], npp[f"dec{i}_b"], L,
                                        stride=2, padding=1, output_padding=1)
        mats.append((M, bias))

    prepared = {}
    for i, (M, bias) in enumerate(mats):
        rows = IN_LANES if i == 0 else PAD               # layer 0 kept at its natural (16,128)
        Mp = np.zeros((rows, PAD), np.float32)
        Mp[:M.shape[0], :M.shape[1]] = M
        bp = np.zeros((PAD,), np.float32)
        bp[:bias.shape[0]] = bias
        prepared[f"w{i}"] = jnp.asarray(Mp, dtype=jnp.bfloat16)       # MXU operand
        prepared[f"b{i}"] = jnp.asarray(bp, dtype=jnp.float32).reshape(1, PAD)
    return prepared


# ---------------------------------------------------------------------------
# Parameter construction (deterministic, PyTorch-style uniform fan-in init)
# ---------------------------------------------------------------------------
def _uniform(key, shape, bound):
    return jax.random.uniform(key, shape, jnp.float32, -bound, bound)


def init_params(key, latent_dim=32):
    ks = jax.random.split(key, 18)
    p = {}
    enc_shapes = [(16, 1, 3), (32, 16, 3), (64, 32, 3)]          # (C_out, C_in, K)
    for i, (co, ci, k) in enumerate(enc_shapes):
        bound = 1.0 / math.sqrt(ci * k)
        p[f"enc{i}_w"] = _uniform(ks[2 * i], (co, ci, k), bound)
        p[f"enc{i}_b"] = _uniform(ks[2 * i + 1], (co,), bound)
    bound = 1.0 / math.sqrt(128)
    p["fc1_w"] = _uniform(ks[6], (latent_dim, 128), bound)        # (out, in)
    p["fc1_b"] = _uniform(ks[7], (latent_dim,), bound)
    bound = 1.0 / math.sqrt(latent_dim)
    p["fc2_w"] = _uniform(ks[8], (128, latent_dim), bound)
    p["fc2_b"] = _uniform(ks[9], (128,), bound)
    dec_shapes = [(64, 32, 3), (32, 16, 3), (16, 1, 3)]           # (C_in, C_out, K)
    for i, (ci, co, k) in enumerate(dec_shapes):
        bound = 1.0 / math.sqrt(ci * k)
        p[f"dec{i}_w"] = _uniform(ks[10 + 2 * i], (ci, co, k), bound)
        p[f"dec{i}_b"] = _uniform(ks[11 + 2 * i], (co,), bound)
    return p


# ---------------------------------------------------------------------------
# Pure-JAX f32 reference (direct conv semantics) for correctness verification
# ---------------------------------------------------------------------------
def _ref_conv1d(x, w, b, stride, padding):
    B, C_in, L = x.shape
    C_out, _, K = w.shape
    L_out = (L + 2 * padding - K) // stride + 1
    xp = jnp.pad(x, ((0, 0), (0, 0), (padding, padding)))
    out = jnp.zeros((B, C_out, L_out), jnp.float32)
    for k in range(K):
        taps = xp[:, :, k:k + stride * L_out:stride]              # (B, C_in, L_out)
        out = out + jnp.einsum("bcl,oc->bol", taps, w[:, :, k])
    return out + b[None, :, None]


def _ref_convT1d(x, w, b, stride, padding, output_padding):
    B, C_in, L = x.shape
    _, C_out, K = w.shape
    L_up = (L - 1) * stride + 1
    x_up = jnp.zeros((B, C_in, L_up), x.dtype).at[:, :, ::stride].set(x)
    pad_l = K - 1 - padding
    pad_r = K - 1 - padding + output_padding
    xp = jnp.pad(x_up, ((0, 0), (0, 0), (pad_l, pad_r)))
    w_conv = jnp.flip(w, axis=2).transpose(1, 0, 2)               # (C_out, C_in, K)
    L_out = xp.shape[2] - K + 1
    out = jnp.zeros((B, C_out, L_out), jnp.float32)
    for k in range(K):
        out = out + jnp.einsum("bcl,oc->bol", xp[:, :, k:k + L_out], w_conv[:, :, k])
    return out + b[None, :, None]


def reference_forward(params, x):
    h = jnp.maximum(_ref_conv1d(x, params["enc0_w"], params["enc0_b"], 2, 1), 0.0)
    h = jnp.maximum(_ref_conv1d(h, params["enc1_w"], params["enc1_b"], 2, 1), 0.0)
    h = jnp.maximum(_ref_conv1d(h, params["enc2_w"], params["enc2_b"], 2, 1), 0.0)
    B = h.shape[0]
    h = h.reshape(B, -1)
    h = h @ params["fc1_w"].T + params["fc1_b"]
    h = h @ params["fc2_w"].T + params["fc2_b"]
    h = h.reshape(B, 64, 2)
    h = jnp.maximum(_ref_convT1d(h, params["dec0_w"], params["dec0_b"], 2, 1, 1), 0.0)
    h = jnp.maximum(_ref_convT1d(h, params["dec1_w"], params["dec1_b"], 2, 1, 1), 0.0)
    h = jax.nn.sigmoid(_ref_convT1d(h, params["dec2_w"], params["dec2_b"], 2, 1, 1))
    return h


if __name__ == "__main__":
    key = jax.random.PRNGKey(0)
    k_params, k_x = jax.random.split(key)

    params = init_params(k_params, latent_dim=32)
    prepared = prepare_params(params)          # one-time: hoisted weight repacking + fc collapse

    B = 16
    x = jax.random.normal(k_x, (B, 1, 16), dtype=jnp.float32)   # layout: NCL

    # block_batch=None -> generation-aware tile choice (1 big step on v5e/v6e, 2 on v7x)
    out = conv_autoencoder_forward(prepared, x)
    out = jax.block_until_ready(out)

    assert out.shape == (B, 1, 16), out.shape
    assert out.dtype == jnp.float32
    assert bool(jnp.all(jnp.isfinite(out)))
    assert bool(jnp.all((out >= 0.0) & (out <= 1.0)))   # sigmoid range (inclusive: f32 can saturate)

    # Verify against a pure-JAX f32 reference of the same module (bf16 MXU operands /
    # bf16-carried intermediates with f32 accumulation -> loose tolerance).
    ref = jax.block_until_ready(reference_forward(params, x))
    np.testing.assert_allclose(np.asarray(out), np.asarray(ref), atol=5e-2, rtol=5e-2)

    print("KERNEL_OK")
</pallas_src>

<mosaic_0001>
module attributes {stable_mosaic.version = 11 : i64} {
  func.func @_fused_ae_kernel(%arg0: i32, %arg1: memref<16x16xf32, #tpu.memory_space<vmem>>, %arg2: memref<16x128xbf16, #tpu.memory_space<vmem>>, %arg3: memref<1x128xf32, #tpu.memory_space<vmem>>, %arg4: memref<128x128xbf16, #tpu.memory_space<vmem>>, %arg5: memref<1x128xf32, #tpu.memory_space<vmem>>, %arg6: memref<128x128xbf16, #tpu.memory_space<vmem>>, %arg7: memref<1x128xf32, #tpu.memory_space<vmem>>, %arg8: memref<128x128xbf16, #tpu.memory_space<vmem>>, %arg9: memref<1x128xf32, #tpu.memory_space<vmem>>, %arg10: memref<128x128xbf16, #tpu.memory_space<vmem>>, %arg11: memref<1x128xf32, #tpu.memory_space<vmem>>, %arg12: memref<128x128xbf16, #tpu.memory_space<vmem>>, %arg13: memref<1x128xf32, #tpu.memory_space<vmem>>, %arg14: memref<128x128xbf16, #tpu.memory_space<vmem>>, %arg15: memref<1x128xf32, #tpu.memory_space<vmem>>, %arg16: memref<16x128xf32, #tpu.memory_space<vmem>>) attributes {dimension_semantics = [#tpu.dimension_semantics<parallel>], iteration_bounds = array<i64: 1>, scalar_prefetch = 0 : i64, scratch_operands = 0 : i64, tpu.core_type = #tpu.core_type<tc>, window_params = [{transform_indices = @transform_0, window_bounds = array<i64: 16, 16>}, {pipeline_mode = #tpu.pipeline_mode<synchronous>, transform_indices = @transform_1, window_bounds = array<i64: 16, 128>}, {pipeline_mode = #tpu.pipeline_mode<synchronous>, transform_indices = @transform_2, window_bounds = array<i64: 1, 128>}, {pipeline_mode = #tpu.pipeline_mode<synchronous>, transform_indices = @transform_3, window_bounds = array<i64: 128, 128>}, {pipeline_mode = #tpu.pipeline_mode<synchronous>, transform_indices = @transform_4, window_bounds = array<i64: 1, 128>}, {pipeline_mode = #tpu.pipeline_mode<synchronous>, transform_indices = @transform_5, window_bounds = array<i64: 128, 128>}, {pipeline_mode = #tpu.pipeline_mode<synchronous>, transform_indices = @transform_6, window_bounds = array<i64: 1, 128>}, {pipeline_mode = #tpu.pipeline_mode<synchronous>, transform_indices = @transform_7, window_bounds = array<i64: 128, 128>}, {pipeline_mode = #tpu.pipeline_mode<synchronous>, transform_indices = @transform_8, window_bounds = array<i64: 1, 128>}, {pipeline_mode = #tpu.pipeline_mode<synchronous>, transform_indices = @transform_9, window_bounds = array<i64: 128, 128>}, {pipeline_mode = #tpu.pipeline_mode<synchronous>, transform_indices = @transform_10, window_bounds = array<i64: 1, 128>}, {pipeline_mode = #tpu.pipeline_mode<synchronous>, transform_indices = @transform_11, window_bounds = array<i64: 128, 128>}, {pipeline_mode = #tpu.pipeline_mode<synchronous>, transform_indices = @transform_12, window_bounds = array<i64: 1, 128>}, {pipeline_mode = #tpu.pipeline_mode<synchronous>, transform_indices = @transform_13, window_bounds = array<i64: 128, 128>}, {pipeline_mode = #tpu.pipeline_mode<synchronous>, transform_indices = @transform_14, window_bounds = array<i64: 1, 128>}, {transform_indices = @transform_15, window_bounds = array<i64: 16, 128>}]} {
    %c0 = arith.constant 0 : index
    %c0_0 = arith.constant 0 : index
    %0 = vector.load %arg1[%c0, %c0_0] : memref<16x16xf32, #tpu.memory_space<vmem>>, vector<16x16xf32>
    %1 = arith.truncf %0 : vector<16x16xf32> to vector<16x16xbf16>
    %c0_1 = arith.constant 0 : index
    %c0_2 = arith.constant 0 : index
    %2 = vector.load %arg2[%c0_1, %c0_2] : memref<16x128xbf16, #tpu.memory_space<vmem>>, vector<16x128xbf16>
    %cst = arith.constant dense<0.000000e+00> : vector<16x128xf32>
    %3 = tpu.matmul %1, %2, %cst {dimension_numbers = #tpu.dot_dimension_numbers<[1], [0], [0], [1], [0, 0, 1, 1], [], []>} : vector<16x16xbf16>, vector<16x128xbf16>, vector<16x128xf32> -> vector<16x128xf32>
    %c0_3 = arith.constant 0 : index
    %c0_4 = arith.constant 0 : index
    %4 = vector.load %arg3[%c0_3, %c0_4] : memref<1x128xf32, #tpu.memory_space<vmem>>, vector<1x128xf32>
    %5 = vector.broadcast %4 : vector<1x128xf32> to vector<16x128xf32>
    %6 = arith.addf %3, %5 : vector<16x128xf32>
    %cst_5 = arith.constant 0.000000e+00 : f32
    %7 = vector.broadcast %cst_5 : f32 to vector<16x128xf32>
    %8 = arith.maximumf %6, %7 : vector<16x128xf32>
    %9 = arith.truncf %8 : vector<16x128xf32> to vector<16x128xbf16>
    %c0_6 = arith.constant 0 : index
    %c0_7 = arith.constant 0 : index
    %10 = vector.load %arg4[%c0_6, %c0_7] : memref<128x128xbf16, #tpu.memory_space<vmem>>, vector<128x128xbf16>
    %cst_8 = arith.constant dense<0.000000e+00> : vector<16x128xf32>
    %11 = tpu.matmul %9, %10, %cst_8 {dimension_numbers = #tpu.dot_dimension_numbers<[1], [0], [0], [1], [0, 0, 1, 1], [], []>} : vector<16x128xbf16>, vector<128x128xbf16>, vector<16x128xf32> -> vector<16x128xf32>
    %c0_9 = arith.constant 0 : index
    %c0_10 = arith.constant 0 : index
    %12 = vector.load %arg5[%c0_9, %c0_10] : memref<1x128xf32, #tpu.memory_space<vmem>>, vector<1x128xf32>
    %13 = vector.broadcast %12 : vector<1x128xf32> to vector<16x128xf32>
    %14 = arith.addf %11, %13 : vector<16x128xf32>
    %cst_11 = arith.constant 0.000000e+00 : f32
    %15 = vector.broadcast %cst_11 : f32 to vector<16x128xf32>
    %16 = arith.maximumf %14, %15 : vector<16x128xf32>
    %17 = arith.truncf %16 : vector<16x128xf32> to vector<16x128xbf16>
    %c0_12 = arith.constant 0 : index
    %c0_13 = arith.constant 0 : index
    %18 = vector.load %arg6[%c0_12, %c0_13] : memref<128x128xbf16, #tpu.memory_space<vmem>>, vector<128x128xbf16>
    %cst_14 = arith.constant dense<0.000000e+00> : vector<16x128xf32>
    %19 = tpu.matmul %17, %18, %cst_14 {dimension_numbers = #tpu.dot_dimension_numbers<[1], [0], [0], [1], [0, 0, 1, 1], [], []>} : vector<16x128xbf16>, vector<128x128xbf16>, vector<16x128xf32> -> vector<16x128xf32>
    %c0_15 = arith.constant 0 : index
    %c0_16 = arith.constant 0 : index
    %20 = vector.load %arg7[%c0_15, %c0_16] : memref<1x128xf32, #tpu.memory_space<vmem>>, vector<1x128xf32>
    %21 = vector.broadcast %20 : vector<1x128xf32> to vector<16x128xf32>
    %22 = arith.addf %19, %21 : vector<16x128xf32>
    %cst_17 = arith.constant 0.000000e+00 : f32
    %23 = vector.broadcast %cst_17 : f32 to vector<16x128xf32>
    %24 = arith.maximumf %22, %23 : vector<16x128xf32>
    %25 = arith.truncf %24 : vector<16x128xf32> to vector<16x128xbf16>
    %c0_18 = arith.constant 0 : index
    %c0_19 = arith.constant 0 : index
    %26 = vector.load %arg8[%c0_18, %c0_19] : memref<128x128xbf16, #tpu.memory_space<vmem>>, vector<128x128xbf16>
    %cst_20 = arith.constant dense<0.000000e+00> : vector<16x128xf32>
    %27 = tpu.matmul %25, %26, %cst_20 {dimension_numbers = #tpu.dot_dimension_numbers<[1], [0], [0], [1], [0, 0, 1, 1], [], []>} : vector<16x128xbf16>, vector<128x128xbf16>, vector<16x128xf32> -> vector<16x128xf32>
    %c0_21 = arith.constant 0 : index
    %c0_22 = arith.constant 0 : index
    %28 = vector.load %arg9[%c0_21, %c0_22] : memref<1x128xf32, #tpu.memory_space<vmem>>, vector<1x128xf32>
    %29 = vector.broadcast %28 : vector<1x128xf32> to vector<16x128xf32>
    %30 = arith.addf %27, %29 : vector<16x128xf32>
    %31 = arith.truncf %30 : vector<16x128xf32> to vector<16x128xbf16>
    %c0_23 = arith.constant 0 : index
    %c0_24 = arith.constant 0 : index
    %32 = vector.load %arg10[%c0_23, %c0_24] : memref<128x128xbf16, #tpu.memory_space<vmem>>, vector<128x128xbf16>
    %cst_25 = arith.constant dense<0.000000e+00> : vector<16x128xf32>
    %33 = tpu.matmul %31, %32, %cst_25 {dimension_numbers = #tpu.dot_dimension_numbers<[1], [0], [0], [1], [0, 0, 1, 1], [], []>} : vector<16x128xbf16>, vector<128x128xbf16>, vector<16x128xf32> -> vector<16x128xf32>
    %c0_26 = arith.constant 0 : index
    %c0_27 = arith.constant 0 : index
    %34 = vector.load %arg11[%c0_26, %c0_27] : memref<1x128xf32, #tpu.memory_space<vmem>>, vector<1x128xf32>
    %35 = vector.broadcast %34 : vector<1x128xf32> to vector<16x128xf32>
    %36 = arith.addf %33, %35 : vector<16x128xf32>
    %cst_28 = arith.constant 0.000000e+00 : f32
    %37 = vector.broadcast %cst_28 : f32 to vector<16x128xf32>
    %38 = arith.maximumf %36, %37 : vector<16x128xf32>
    %39 = arith.truncf %38 : vector<16x128xf32> to vector<16x128xbf16>
    %c0_29 = arith.constant 0 : index
    %c0_30 = arith.constant 0 : index
    %40 = vector.load %arg12[%c0_29, %c0_30] : memref<128x128xbf16, #tpu.memory_space<vmem>>, vector<128x128xbf16>
    %cst_31 = arith.constant dense<0.000000e+00> : vector<16x128xf32>
    %41 = tpu.matmul %39, %40, %cst_31 {dimension_numbers = #tpu.dot_dimension_numbers<[1], [0], [0], [1], [0, 0, 1, 1], [], []>} : vector<16x128xbf16>, vector<128x128xbf16>, vector<16x128xf32> -> vector<16x128xf32>
    %c0_32 = arith.constant 0 : index
    %c0_33 = arith.constant 0 : index
    %42 = vector.load %arg13[%c0_32, %c0_33] : memref<1x128xf32, #tpu.memory_space<vmem>>, vector<1x128xf32>
    %43 = vector.broadcast %42 : vector<1x128xf32> to vector<16x128xf32>
    %44 = arith.addf %41, %43 : vector<16x128xf32>
    %cst_34 = arith.constant 0.000000e+00 : f32
    %45 = vector.broadcast %cst_34 : f32 to vector<16x128xf32>
    %46 = arith.maximumf %44, %45 : vector<16x128xf32>
    %47 = arith.truncf %46 : vector<16x128xf32> to vector<16x128xbf16>
    %c0_35 = arith.constant 0 : index
    %c0_36 = arith.constant 0 : index
    %48 = vector.load %arg14[%c0_35, %c0_36] : memref<128x128xbf16, #tpu.memory_space<vmem>>, vector<128x128xbf16>
    %cst_37 = arith.constant dense<0.000000e+00> : vector<16x128xf32>
    %49 = tpu.matmul %47, %48, %cst_37 {dimension_numbers = #tpu.dot_dimension_numbers<[1], [0], [0], [1], [0, 0, 1, 1], [], []>} : vector<16x128xbf16>, vector<128x128xbf16>, vector<16x128xf32> -> vector<16x128xf32>
    %c0_38 = arith.constant 0 : index
    %c0_39 = arith.constant 0 : index
    %50 = vector.load %arg15[%c0_38, %c0_39] : memref<1x128xf32, #tpu.memory_space<vmem>>, vector<1x128xf32>
    %51 = vector.broadcast %50 : vector<1x128xf32> to vector<16x128xf32>
    %52 = arith.addf %49, %51 : vector<16x128xf32>
    %53 = arith.negf %52 : vector<16x128xf32>
    %54 = math.exp %53 : vector<16x128xf32>
    %cst_40 = arith.constant 1.000000e+00 : f32
    %55 = vector.broadcast %cst_40 : f32 to vector<16x128xf32>
    %56 = arith.addf %55, %54 : vector<16x128xf32>
    %57 = arith.divf %55, %56 : vector<16x128xf32>
    %c0_41 = arith.constant 0 : index
    %c0_42 = arith.constant 0 : index
    %58 = vector.load %arg16[%c0_41, %c0_42] : memref<16x128xf32, #tpu.memory_space<vmem>>, vector<16x128xf32>
    tpu.vector_store %arg16[%c0_41, %c0_42], %57 {strides = array<i32>} : memref<16x128xf32, #tpu.memory_space<vmem>>, vector<16x128xf32>,
    return
  }
  func.func @transform_0(%arg0: i32) -> (i32, i32) {
    %c0_i32 = arith.constant 0 : i32
    %c0_i32_0 = arith.constant 0 : i32
    return %arg0, %c0_i32 : i32, i32
  }
  func.func @transform_1(%arg0: i32) -> (i32, i32) {
    %c0_i32 = arith.constant 0 : i32
    %c0_i32_0 = arith.constant 0 : i32
    %c0_i32_1 = arith.constant 0 : i32
    return %c0_i32, %c0_i32_0 : i32, i32
  }
  func.func @transform_2(%arg0: i32) -> (i32, i32) {
    %c0_i32 = arith.constant 0 : i32
    %c0_i32_0 = arith.constant 0 : i32
    %c0_i32_1 = arith.constant 0 : i32
    return %c0_i32, %c0_i32_0 : i32, i32
  }
  func.func @transform_3(%arg0: i32) -> (i32, i32) {
    %c0_i32 = arith.constant 0 : i32
    %c0_i32_0 = arith.constant 0 : i32
    %c0_i32_1 = arith.constant 0 : i32
    return %c0_i32, %c0_i32_0 : i32, i32
  }
  func.func @transform_4(%arg0: i32) -> (i32, i32) {
    %c0_i32 = arith.constant 0 : i32
    %c0_i32_0 = arith.constant 0 : i32
    %c0_i32_1 = arith.constant 0 : i32
    return %c0_i32, %c0_i32_0 : i32, i32
  }
  func.func @transform_5(%arg0: i32) -> (i32, i32) {
    %c0_i32 = arith.constant 0 : i32
    %c0_i32_0 = arith.constant 0 : i32
    %c0_i32_1 = arith.constant 0 : i32
    return %c0_i32, %c0_i32_0 : i32, i32
  }
  func.func @transform_6(%arg0: i32) -> (i32, i32) {
    %c0_i32 = arith.constant 0 : i32
    %c0_i32_0 = arith.constant 0 : i32
    %c0_i32_1 = arith.constant 0 : i32
    return %c0_i32, %c0_i32_0 : i32, i32
  }
  func.func @transform_7(%arg0: i32) -> (i32, i32) {
    %c0_i32 = arith.constant 0 : i32
    %c0_i32_0 = arith.constant 0 : i32
    %c0_i32_1 = arith.constant 0 : i32
    return %c0_i32, %c0_i32_0 : i32, i32
  }
  func.func @transform_8(%arg0: i32) -> (i32, i32) {
    %c0_i32 = arith.constant 0 : i32
    %c0_i32_0 = arith.constant 0 : i32
    %c0_i32_1 = arith.constant 0 : i32
    return %c0_i32, %c0_i32_0 : i32, i32
  }
  func.func @transform_9(%arg0: i32) -> (i32, i32) {
    %c0_i32 = arith.constant 0 : i32
    %c0_i32_0 = arith.constant 0 : i32
    %c0_i32_1 = arith.constant 0 : i32
    return %c0_i32, %c0_i32_0 : i32, i32
  }
  func.func @transform_10(%arg0: i32) -> (i32, i32) {
    %c0_i32 = arith.constant 0 : i32
    %c0_i32_0 = arith.constant 0 : i32
    %c0_i32_1 = arith.constant 0 : i32
    return %c0_i32, %c0_i32_0 : i32, i32
  }
  func.func @transform_11(%arg0: i32) -> (i32, i32) {
    %c0_i32 = arith.constant 0 : i32
    %c0_i32_0 = arith.constant 0 : i32
    %c0_i32_1 = arith.constant 0 : i32
    return %c0_i32, %c0_i32_0 : i32, i32
  }
  func.func @transform_12(%arg0: i32) -> (i32, i32) {
    %c0_i32 = arith.constant 0 : i32
    %c0_i32_0 = arith.constant 0 : i32
    %c0_i32_1 = arith.constant 0 : i32
    return %c0_i32, %c0_i32_0 : i32, i32
  }
  func.func @transform_13(%arg0: i32) -> (i32, i32) {
    %c0_i32 = arith.constant 0 : i32
    %c0_i32_0 = arith.constant 0 : i32
    %c0_i32_1 = arith.constant 0 : i32
    return %c0_i32, %c0_i32_0 : i32, i32
  }
  func.func @transform_14(%arg0: i32) -> (i32, i32) {
    %c0_i32 = arith.constant 0 : i32
    %c0_i32_0 = arith.constant 0 : i32
    %c0_i32_1 = arith.constant 0 : i32
    return %c0_i32, %c0_i32_0 : i32, i32
  }
  func.func @transform_15(%arg0: i32) -> (i32, i32) {
    %c0_i32 = arith.constant 0 : i32
    %c0_i32_0 = arith.constant 0 : i32
    return %arg0, %c0_i32 : i32, i32
  }
}

</mosaic_0001>

<llo_original>
// kernel: conv_autoencoder_forward.1
$region0: #{conv_autoencoder_forward.1}
  #allocation0 [shape = 'u32[]', space=smem, size = 0x4, offset = 0x4, fixed_abs, tag = 'smem constant byte address 0x4 - core index']
  #allocation1 [shape = 'u32[144,128]{1,0:T(1,128)}', space=vmem, size = 0x12000, scoped, tag = 'internal scratch']
  %s0 = inlined_call_operand.vmem [shape: f32[16,16], index: 0, kind: input, shape index: {}]
  %s1 = inlined_call_operand.vmem [shape: bf16[16,128], index: 1, kind: input, shape index: {}]
  %s2 = inlined_call_operand.vmem [shape: f32[1,128], index: 2, kind: input, shape index: {}]
  %s3 = inlined_call_operand.hbm [shape: bf16[128,128], index: 3, kind: input, shape index: {}]
  %s4 = inlined_call_operand.vmem [shape: f32[1,128], index: 4, kind: input, shape index: {}]
  %s5 = inlined_call_operand.hbm [shape: bf16[128,128], index: 5, kind: input, shape index: {}]
  %s6 = inlined_call_operand.vmem [shape: f32[1,128], index: 6, kind: input, shape index: {}]
  %s7 = inlined_call_operand.hbm [shape: bf16[128,128], index: 7, kind: input, shape index: {}]
  %s8 = inlined_call_operand.hbm [shape: f32[1,128], index: 8, kind: input, shape index: {}]
  %s9 = inlined_call_operand.hbm [shape: bf16[128,128], index: 9, kind: input, shape index: {}]
  %s10 = inlined_call_operand.hbm [shape: f32[1,128], index: 10, kind: input, shape index: {}]
  %s11 = inlined_call_operand.hbm [shape: bf16[128,128], index: 11, kind: input, shape index: {}]
  %s12 = inlined_call_operand.hbm [shape: f32[1,128], index: 12, kind: input, shape index: {}]
  %s13 = inlined_call_operand.hbm [shape: bf16[128,128], index: 13, kind: input, shape index: {}]
  %s14 = inlined_call_operand.hbm [shape: f32[1,128], index: 14, kind: input, shape index: {}]
  %s15 = inlined_call_operand.hbm [shape: f32[16,128], index: 15, kind: output, shape index: {}]
  %s16 = sld [smem:[#allocation0]]
  $region110: #{conv_autoencoder_forward.1} parent=0
    _
  %s18 = ssub.s32 1, %s16
  %s19 = scalar_select 0, %s18, %s16
  $region1: #{conv_autoencoder_forward.1} parent=0
    #allocation2 [shape = 'u8[32768]{0}', space=vmem, size = 0x8000, scoped, tag = 'input window, operand 3, single buffered']
    #allocation3 [shape = 's32[1]{0}', space=sflag, size = 0x4, scoped, tag = 'scoped memory for conv_autoencoder_forward.1']
    #allocation4 [shape = 's32[1]{0}', space=sflag, size = 0x4, scoped, tag = 'scoped memory for conv_autoencoder_forward.1']
    #allocation5 [shape = 'u8[32768]{0}', space=vmem, size = 0x8000, scoped, tag = 'input window, operand 5, single buffered']
    #allocation6 [shape = 's32[1]{0}', space=sflag, size = 0x4, scoped, tag = 'scoped memory for conv_autoencoder_forward.1']
    #allocation7 [shape = 'u8[32768]{0}', space=vmem, size = 0x8000, scoped, tag = 'input window, operand 7, single buffered']
    #allocation8 [shape = 'u8[512]{0}', space=vmem, size = 0x400, scoped, tag = 'input window, operand 8, single buffered']
    #allocation9 [shape = 's32[1]{0}', space=sflag, size = 0x4, scoped, tag = 'scoped memory for conv_autoencoder_forward.1']
    #allocation10 [shape = 'u8[32768]{0}', space=vmem, size = 0x8000, scoped, tag = 'input window, operand 9, single buffered']
    #allocation11 [shape = 'u8[512]{0}', space=vmem, size = 0x400, scoped, tag = 'input window, operand 10, single buffered']
    #allocation12 [shape = 's32[1]{0}', space=sflag, size = 0x4, scoped, tag = 'scoped memory for conv_autoencoder_forward.1']
    #allocation13 [shape = 'u8[32768]{0}', space=vmem, size = 0x8000, scoped, tag = 'input window, operand 11, single buffered']
    #allocation14 [shape = 'u8[512]{0}', space=vmem, size = 0x400, scoped, tag = 'input window, operand 12, single buffered']
    #allocation15 [shape = 's32[1]{0}', space=sflag, size = 0x4, scoped, tag = 'scoped memory for conv_autoencoder_forward.1']
    #allocation16 [shape = 'u8[32768]{0}', space=vmem, size = 0x8000, scoped, tag = 'input window, operand 13, single buffered']
    #allocation17 [shape = 'u8[512]{0}', space=vmem, size = 0x400, scoped, tag = 'input window, operand 14, single buffered']
    #allocation18 [shape = 's32[1]{0}', space=sflag, size = 0x4, scoped, tag = 'scoped memory for conv_autoencoder_forward.1']
    #allocation19 [shape = 'u8[8192]{0}', space=vmem, size = 0x2000, scoped, tag = 'output window, operand 0, single buffered']
    %20 = vsyncpa [#allocation3], 0
    %21 = vsyncpa [#allocation6], 0
    %22 = vsyncpa [#allocation9], 0
    %23 = vsyncpa [#allocation12], 0
    %24 = vsyncpa [#allocation15], 0
    %25 = vsyncpa [#allocation18], 0
    %26 = vsyncpa [#allocation4], 0
    // Predicated region
    $region2: #{conv_autoencoder_forward.1} parent=1 // pred_check
      _
    $region3: #{conv_autoencoder_forward.1} parent=1 // pred_check_branch
      %28 = sbr.rel (0) target = $region5
    $region4: #{conv_autoencoder_forward.1} parent=1 // pred_region
      _
    $region5: #{conv_autoencoder_forward.1} parent=1 // pred_fallthru
      _
    // Predicated region
    $region6: #{conv_autoencoder_forward.1} parent=1 // pred_check
      _
    $region7: #{conv_autoencoder_forward.1} parent=1 // pred_check_branch
      %30 = sbr.rel (0) target = $region9
    $region8: #{conv_autoencoder_forward.1} parent=1 // pred_region
      _
    $region9: #{conv_autoencoder_forward.1} parent=1 // pred_fallthru
      _
    // Predicated region
    $region10: #{conv_autoencoder_forward.1} parent=1 // pred_check
      _
    $region11: #{conv_autoencoder_forward.1} parent=1 // pred_check_branch
      %32 = sbr.rel (0) target = $region13
    $region12: #{conv_autoencoder_forward.1} parent=1 // pred_region
      _
    $region13: #{conv_autoencoder_forward.1} parent=1 // pred_fallthru
      _
    // Predicated region
    $region14: #{conv_autoencoder_forward.1} parent=1 // pred_check
      _
    $region15: #{conv_autoencoder_forward.1} parent=1 // pred_check_branch
      %34 = sbr.rel (0) target = $region17
    $region16: #{conv_autoencoder_forward.1} parent=1 // pred_region
      %s36 = ssub.s32 1024, 1024
      %37 = vsyncadd [#allocation3], %s36
      %s38 = sshll.u32 [#allocation2], 4
      %s39 = int_to_ptr.vmem [resolvable:$true] %s38
      %44 = dma.hbm_to_vmem [thread:$0]  %s3, 1024, %s39, [#allocation3], 64, 64, 4
    $region17: #{conv_autoencoder_forward.1} parent=1 // pred_fallthru
      _
    // Predicated region
    $region18: #{conv_autoencoder_forward.1} parent=1 // pred_check
      _
    $region19: #{conv_autoencoder_forward.1} parent=1 // pred_check_branch
      %46 = sbr.rel (0) target = $region21
    $region20: #{conv_autoencoder_forward.1} parent=1 // pred_region
      _
    $region21: #{conv_autoencoder_forward.1} parent=1 // pred_fallthru
      _
    // Predicated region
    $region22: #{conv_autoencoder_forward.1} parent=1 // pred_check
      _
    $region23: #{conv_autoencoder_forward.1} parent=1 // pred_check_branch
      %48 = sbr.rel (0) target = $region25
    $region24: #{conv_autoencoder_forward.1} parent=1 // pred_region
      %s50 = ssub.s32 1024, 1024
      %51 = vsyncadd [#allocation6], %s50
      %s52 = sshll.u32 [#allocation5], 4
      %s53 = int_to_ptr.vmem [resolvable:$true] %s52
      %58 = dma.hbm_to_vmem [thread:$0]  %s5, 1024, %s53, [#allocation6], 64, 64, 4
    $region25: #{conv_autoencoder_forward.1} parent=1 // pred_fallthru
      _
    // Predicated region
    $region26: #{conv_autoencoder_forward.1} parent=1 // pred_check
      _
    $region27: #{conv_autoencoder_forward.1} parent=1 // pred_check_branch
      %60 = sbr.rel (0) target = $region29
    $region28: #{conv_autoencoder_forward.1} parent=1 // pred_region
      _
    $region29: #{conv_autoencoder_forward.1} parent=1 // pred_fallthru
      _
    // Predicated region
    $region30: #{conv_autoencoder_forward.1} parent=1 // pred_check
      _
    $region31: #{conv_autoencoder_forward.1} parent=1 // pred_check_branch
      %62 = sbr.rel (0) target = $region33
    $region32: #{conv_autoencoder_forward.1} parent=1 // pred_region
      %s64 = ssub.s32 1024, 1024
      %65 = vsyncadd [#allocation6], %s64
      %s66 = sshll.u32 [#allocation7], 4
      %s67 = int_to_ptr.vmem [resolvable:$true] %s66
      %72 = dma.hbm_to_vmem [thread:$0]  %s7, 1024, %s67, [#allocation6], 64, 64, 4
    $region33: #{conv_autoencoder_forward.1} parent=1 // pred_fallthru
      _
    // Predicated region
    $region34: #{conv_autoencoder_forward.1} parent=1 // pred_check
      _
    $region35: #{conv_autoencoder_forward.1} parent=1 // pred_check_branch
      %74 = sbr.rel (0) target = $region37
    $region36: #{conv_autoencoder_forward.1} parent=1 // pred_region
      %s76 = ssub.s32 16, 16
      %77 = vsyncadd [#allocation9], %s76
      %s79 = sshll.u32 [#allocation8], 4
      %s80 = int_to_ptr.vmem [resolvable:$true] %s79
      %82 = dma.hbm_to_vmem [thread:$0]  %s8, 16, %s80, [#allocation9]
    $region37: #{conv_autoencoder_forward.1} parent=1 // pred_fallthru
      _
    // Predicated region
    $region38: #{conv_autoencoder_forward.1} parent=1 // pred_check
      _
    $region39: #{conv_autoencoder_forward.1} parent=1 // pred_check_branch
      %84 = sbr.rel (0) target = $region41
    $region40: #{conv_autoencoder_forward.1} parent=1 // pred_region
      %s86 = ssub.s32 1024, 1024
      %87 = vsyncadd [#allocation9], %s86
      %s88 = sshll.u32 [#allocation10], 4
      %s89 = int_to_ptr.vmem [resolvable:$true] %s88
      %94 = dma.hbm_to_vmem [thread:$0]  %s9, 1024, %s89, [#allocation9], 64, 64, 4
    $region41: #{conv_autoencoder_forward.1} parent=1 // pred_fallthru
      _
    // Predicated region
    $region42: #{conv_autoencoder_forward.1} parent=1 // pred_check
      _
    $region43: #{conv_autoencoder_forward.1} parent=1 // pred_check_branch
      %96 = sbr.rel (0) target = $region45
    $region44: #{conv_autoencoder_forward.1} parent=1 // pred_region
      %s98 = ssub.s32 16, 16
      %99 = vsyncadd [#allocation12], %s98
      %s101 = sshll.u32 [#allocation11], 4
      %s102 = int_to_ptr.vmem [resolvable:$true] %s101
      %104 = dma.hbm_to_vmem [thread:$0]  %s10, 16, %s102, [#allocation12]
    $region45: #{conv_autoencoder_forward.1} parent=1 // pred_fallthru
      _
    // Predicated region
    $region46: #{conv_autoencoder_forward.1} parent=1 // pred_check
      _
    $region47: #{conv_autoencoder_forward.1} parent=1 // pred_check_branch
      %106 = sbr.rel (0) target = $region49
    $region48: #{conv_autoencoder_forward.1} parent=1 // pred_region
      %s108 = ssub.s32 1024, 1024
      %109 = vsyncadd [#allocation12], %s108
      %s110 = sshll.u32 [#allocation13], 4
      %s111 = int_to_ptr.vmem [resolvable:$true] %s110
      %116 = dma.hbm_to_vmem [thread:$0]  %s11, 1024, %s111, [#allocation12], 64, 64, 4
    $region49: #{conv_autoencoder_forward.1} parent=1 // pred_fallthru
      _
    // Predicated region
    $region50: #{conv_autoencoder_forward.1} parent=1 // pred_check
      _
    $region51: #{conv_autoencoder_forward.1} parent=1 // pred_check_branch
      %118 = sbr.rel (0) target = $region53
    $region52: #{conv_autoencoder_forward.1} parent=1 // pred_region
      %s120 = ssub.s32 16, 16
      %121 = vsyncadd [#allocation15], %s120
      %s123 = sshll.u32 [#allocation14], 4
      %s124 = int_to_ptr.vmem [resolvable:$true] %s123
      %126 = dma.hbm_to_vmem [thread:$0]  %s12, 16, %s124, [#allocation15]
    $region53: #{conv_autoencoder_forward.1} parent=1 // pred_fallthru
      _
    // Predicated region
    $region54: #{conv_autoencoder_forward.1} parent=1 // pred_check
      _
    $region55: #{conv_autoencoder_forward.1} parent=1 // pred_check_branch
      %128 = sbr.rel (0) target = $region57
    $region56: #{conv_autoencoder_forward.1} parent=1 // pred_region
      %s130 = ssub.s32 1024, 1024
      %131 = vsyncadd [#allocation15], %s130
      %s132 = sshll.u32 [#allocation16], 4
      %s133 = int_to_ptr.vmem [resolvable:$true] %s132
      %138 = dma.hbm_to_vmem [thread:$0]  %s13, 1024, %s133, [#allocation15], 64, 64, 4
    $region57: #{conv_autoencoder_forward.1} parent=1 // pred_fallthru
      _
    // Predicated region
    $region58: #{conv_autoencoder_forward.1} parent=1 // pred_check
      _
    $region59: #{conv_autoencoder_forward.1} parent=1 // pred_check_branch
      %140 = sbr.rel (0) target = $region61
    $region60: #{conv_autoencoder_forward.1} parent=1 // pred_region
      %s142 = ssub.s32 16, 16
      %143 = vsyncadd [#allocation18], %s142
      %s145 = sshll.u32 [#allocation17], 4
      %s146 = int_to_ptr.vmem [resolvable:$true] %s145
      %148 = dma.hbm_to_vmem [thread:$0]  %s14, 16, %s146, [#allocation18]
    $region61: #{conv_autoencoder_forward.1} parent=1 // pred_fallthru
      _
    // Predicated region
    $region62: #{conv_autoencoder_forward.1} parent=1 // pred_check
      _
    $region63: #{conv_autoencoder_forward.1} parent=1 // pred_check_branch
      %150 = sbr.rel (0) target = $region65
    $region64: #{conv_autoencoder_forward.1} parent=1 // pred_region
      %151 = dma.done [#allocation3], 1024
    $region65: #{conv_autoencoder_forward.1} parent=1 // pred_fallthru
      _
    // Predicated region
    $region66: #{conv_autoencoder_forward.1} parent=1 // pred_check
      _
    $region67: #{conv_autoencoder_forward.1} parent=1 // pred_check_branch
      %153 = sbr.rel (0) target = $region69
    $region68: #{conv_autoencoder_forward.1} parent=1 // pred_region
      %154 = dma.done [#allocation6], 1024
    $region69: #{conv_autoencoder_forward.1} parent=1 // pred_fallthru
      _
    // Predicated region
    $region70: #{conv_autoencoder_forward.1} parent=1 // pred_check
      _
    $region71: #{conv_autoencoder_forward.1} parent=1 // pred_check_branch
      %156 = sbr.rel (0) target = $region73
    $region72: #{conv_autoencoder_forward.1} parent=1 // pred_region
      %157 = dma.done [#allocation6], 1024
    $region73: #{conv_autoencoder_forward.1} parent=1 // pred_fallthru
      _
    // Predicated region
    $region74: #{conv_autoencoder_forward.1} parent=1 // pred_check
      _
    $region75: #{conv_autoencoder_forward.1} parent=1 // pred_check_branch
      %159 = sbr.rel (0) target = $region77
    $region76: #{conv_autoencoder_forward.1} parent=1 // pred_region
      %160 = dma.done [#allocation9], 16
    $region77: #{conv_autoencoder_forward.1} parent=1 // pred_fallthru
      _
    // Predicated region
    $region78: #{conv_autoencoder_forward.1} parent=1 // pred_check
      _
    $region79: #{conv_autoencoder_forward.1} parent=1 // pred_check_branch
      %162 = sbr.rel (0) target = $region81
    $region80: #{conv_autoencoder_forward.1} parent=1 // pred_region
      %163 = dma.done [#allocation9], 1024
    $region81: #{conv_autoencoder_forward.1} parent=1 // pred_fallthru
      _
    // Predicated region
    $region82: #{conv_autoencoder_forward.1} parent=1 // pred_check
      _
    $region83: #{conv_autoencoder_forward.1} parent=1 // pred_check_branch
      %165 = sbr.rel (0) target = $region85
    $region84: #{conv_autoencoder_forward.1} parent=1 // pred_region
      %166 = dma.done [#allocation12], 16
    $region85: #{conv_autoencoder_forward.1} parent=1 // pred_fallthru
      _
    // Predicated region
    $region86: #{conv_autoencoder_forward.1} parent=1 // pred_check
      _
    $region87: #{conv_autoencoder_forward.1} parent=1 // pred_check_branch
      %168 = sbr.rel (0) target = $region89
    $region88: #{conv_autoencoder_forward.1} parent=1 // pred_region
      %169 = dma.done [#allocation12], 1024
    $region89: #{conv_autoencoder_forward.1} parent=1 // pred_fallthru
      _
    // Predicated region
    $region90: #{conv_autoencoder_forward.1} parent=1 // pred_check
      _
    $region91: #{conv_autoencoder_forward.1} parent=1 // pred_check_branch
      %171 = sbr.rel (0) target = $region93
    $region92: #{conv_autoencoder_forward.1} parent=1 // pred_region
      %172 = dma.done [#allocation15], 16
    $region93: #{conv_autoencoder_forward.1} parent=1 // pred_fallthru
      _
    // Predicated region
    $region94: #{conv_autoencoder_forward.1} parent=1 // pred_check
      _
    $region95: #{conv_autoencoder_forward.1} parent=1 // pred_check_branch
      %174 = sbr.rel (0) target = $region97
    $region96: #{conv_autoencoder_forward.1} parent=1 // pred_region
      %175 = dma.done [#allocation15], 1024
    $region97: #{conv_autoencoder_forward.1} parent=1 // pred_fallthru
      _
    // Predicated region
    $region98: #{conv_autoencoder_forward.1} parent=1 // pred_check
      _
    $region99: #{conv_autoencoder_forward.1} parent=1 // pred_check_branch
      %177 = sbr.rel (0) target = $region101
    $region100: #{conv_autoencoder_forward.1} parent=1 // pred_region
      %178 = dma.done [#allocation18], 16
    $region101: #{conv_autoencoder_forward.1} parent=1 // pred_fallthru
      _
    %v180 = vld [vmem:[%s0] sm:$0xff]
    %v181 = vld [vmem:[%s0 + $0x8] sm:$0xff]
    %v182 = vpack.c.bf16 %v181, %v180
    %v183 = vld [vmem:[%s1] sm:$0xf]
    %v184 = vld [vmem:[%s1 + $0x4] sm:$0xf]
    %v185 = vld [vmem:[%s2] sm:$0x1]
    %v187 = vlaneseq
    %v188 = vshrl.u32 %v187, 7
    %v189 = vsub.s32 0, %v188
    %v190 = vrot.slane %v185, %v189
    %v194 = vunpack.c.l.b16 %v183
    %v195 = vunpack.c.l.b16 %v184
    %v196 = vpack.c.b16 %v195, %v194
    %vm198 = vcmask 130048
    %v200 = vsel %vm198, %v182, 0
    %202 = vmatprep.subr.bf16.mxu0 0
    %203 = vmatpush1.bf16.msra.mxu0 0
    %204 = vmatprep.subr.bf16.mxu0 0
    %205 = vmatpush1.bf16.msra.mxu0 0
    %206 = vmatprep.subr.bf16.mxu0 0
    %207 = vmatpush1.bf16.msra.mxu0 0
    %208 = vmatprep.subr.bf16.mxu0 0
    %209 = vmatpush1.bf16.msra.mxu0 0
    %210 = vmatprep.subr.bf16.mxu0 0
    %211 = vmatpush1.bf16.msra.mxu0 0
    %212 = vmatprep.subr.bf16.mxu0 0
    %213 = vmatpush1.bf16.msra.mxu0 0
    %214 = vmatprep.subr.bf16.mxu0 0
    %215 = vmatpush1.bf16.msra.mxu0 0
    %216 = vmatprep.subr.bf16.mxu0 0
    %217 = vmatpush1.bf16.msra.mxu0 %v196
    %218 = vmatprep.subr.bf16.mxu0 0
    %219 = vmatpush2.bf16.msra.mxu0 0
    %220 = vmatprep.subr.bf16.mxu0 0
    %221 = vmatpush2.bf16.msra.mxu0 0
    %222 = vmatprep.subr.bf16.mxu0 0
    %223 = vmatpush2.bf16.msra.mxu0 0
    %224 = vmatprep.subr.bf16.mxu0 0
    %225 = vmatpush2.bf16.msra.mxu0 0
    %226 = vmatprep.subr.bf16.mxu0 0
    %227 = vmatpush2.bf16.msra.mxu0 0
    %228 = vmatprep.subr.bf16.mxu0 0
    %229 = vmatpush2.bf16.msra.mxu0 0
    %230 = vmatprep.subr.bf16.mxu0 0
    %231 = vmatpush2.bf16.msra.mxu0 0
    %232 = vmatprep.subr.bf16.mxu0 0
    %233 = vmatpush2.bf16.msra.mxu0 0
    %234 = vmatprep.mubr.bf16.mxu0 0
    %235 = vmatmul.mubr.bf16.gmra.mxu0 %v200
    %v236 = vpop.f32.mrf.mxu0
    %v237 = vadd.f32 %v190, %v236
    %v238 = vpop.f32.mrf.mxu0
    %v239 = vpop.f32.mrf.mxu0
    %v240 = vadd.f32 %v190, %v239
    %v241 = vpop.f32.mrf.mxu0
    %242 = vdwg.mxu0
    %v243 = vmax.f32 %v237, 0.0
    %v244 = vmax.f32 %v240, 0.0
    %v245 = vpack.c.bf16 %v244, %v243
    %v246 = vld [vmem:[#allocation2] sm:$0xf]
    %v247 = vld [vmem:[#allocation2 + $0x4] sm:$0xf]
    %v248 = vld [vmem:[#allocation2 + $0x8] sm:$0xf]
    %v249 = vld [vmem:[#allocation2 + $0xc] sm:$0xf]
    %v250 = vld [vmem:[#allocation2 + $0x10] sm:$0xf]
    %v251 = vld [vmem:[#allocation2 + $0x14] sm:$0xf]
    %v252 = vld [vmem:[#allocation2 + $0x18] sm:$0xf]
    %v253 = vld [vmem:[#allocation2 + $0x1c] sm:$0xf]
    %v254 = vld [vmem:[#allocation2 + $0x20] sm:$0xf]
    %v255 = vld [vmem:[#allocation2 + $0x24] sm:$0xf]
    %v256 = vld [vmem:[#allocation2 + $0x28] sm:$0xf]
    %v257 = vld [vmem:[#allocation2 + $0x2c] sm:$0xf]
    %v258 = vld [vmem:[#allocation2 + $0x30] sm:$0xf]
    %v259 = vld [vmem:[#allocation2 + $0x34] sm:$0xf]
    %v260 = vld [vmem:[#allocation2 + $0x38] sm:$0xf]
    %v261 = vld [vmem:[#allocation2 + $0x3c] sm:$0xf]
    %v262 = vld [vmem:[%s4] sm:$0x1]
    %v264 = vlaneseq
    %v265 = vshrl.u32 %v264, 7
    %v266 = vsub.s32 0, %v265
    %v267 = vrot.slane %v262, %v266
    %v285 = vunpack.c.l.b16 %v246
    %v286 = vunpack.c.l.b16 %v247
    %v287 = vunpack.c.l.b16 %v248
    %v288 = vunpack.c.l.b16 %v249
    %v289 = vunpack.c.l.b16 %v250
    %v290 = vunpack.c.l.b16 %v251
    %v291 = vunpack.c.l.b16 %v252
    %v292 = vunpack.c.l.b16 %v253
    %v293 = vunpack.c.l.b16 %v254
    %v294 = vunpack.c.l.b16 %v255
    %v295 = vunpack.c.l.b16 %v256
    %v296 = vunpack.c.l.b16 %v257
    %v297 = vunpack.c.l.b16 %v258
    %v298 = vunpack.c.l.b16 %v259
    %v299 = vunpack.c.l.b16 %v260
    %v300 = vunpack.c.l.b16 %v261
    %v301 = vpack.c.b16 %v286, %v285
    %v302 = vpack.c.b16 %v288, %v287
    %v303 = vpack.c.b16 %v290, %v289
    %v304 = vpack.c.b16 %v292, %v291
    %v305 = vpack.c.b16 %v294, %v293
    %v306 = vpack.c.b16 %v296, %v295
    %v307 = vpack.c.b16 %v298, %v297
    %v308 = vpack.c.b16 %v300, %v299
    %317 = vmatprep.subr.bf16.mxu0 0
    %318 = vmatpush1.bf16.msra.mxu0 %v308
    %319 = vmatprep.subr.bf16.mxu0 0
    %320 = vmatpush1.bf16.msra.mxu0 %v307
    %321 = vmatprep.subr.bf16.mxu0 0
    %322 = vmatpush1.bf16.msra.mxu0 %v306
    %323 = vmatprep.subr.bf16.mxu0 0
    %324 = vmatpush1.bf16.msra.mxu0 %v305
    %325 = vmatprep.subr.bf16.mxu0 0
    %326 = vmatpush1.bf16.msra.mxu0 %v304
    %327 = vmatprep.subr.bf16.mxu0 0
    %328 = vmatpush1.bf16.msra.mxu0 %v303
    %329 = vmatprep.subr.bf16.mxu0 0
    %330 = vmatpush1.bf16.msra.mxu0 %v302
    %331 = vmatprep.subr.bf16.mxu0 0
    %332 = vmatpush1.bf16.msra.mxu0 %v301
    %333 = vmatprep.subr.bf16.mxu0 0
    %334 = vmatpush2.bf16.msra.mxu0 0
    %335 = vmatprep.subr.bf16.mxu0 0
    %336 = vmatpush2.bf16.msra.mxu0 0
    %337 = vmatprep.subr.bf16.mxu0 0
    %338 = vmatpush2.bf16.msra.mxu0 0
    %339 = vmatprep.subr.bf16.mxu0 0
    %340 = vmatpush2.bf16.msra.mxu0 0
    %341 = vmatprep.subr.bf16.mxu0 0
    %342 = vmatpush2.bf16.msra.mxu0 0
    %343 = vmatprep.subr.bf16.mxu0 0
    %344 = vmatpush2.bf16.msra.mxu0 0
    %345 = vmatprep.subr.bf16.mxu0 0
    %346 = vmatpush2.bf16.msra.mxu0 0
    %347 = vmatprep.subr.bf16.mxu0 0
    %348 = vmatpush2.bf16.msra.mxu0 0
    %349 = vmatprep.mubr.bf16.mxu0 0
    %350 = vmatmul.mubr.bf16.gmra.mxu0 %v245
    %v351 = vpop.f32.mrf.mxu0
    %v352 = vadd.f32 %v267, %v351
    %v353 = vpop.f32.mrf.mxu0
    %v354 = vpop.f32.mrf.mxu0
    %v355 = vadd.f32 %v267, %v354
    %v356 = vpop.f32.mrf.mxu0
    %357 = vdwg.mxu0
    %v358 = vmax.f32 %v352, 0.0
    %v359 = vmax.f32 %v355, 0.0
    %v360 = vpack.c.bf16 %v359, %v358
    %v361 = vld [vmem:[#allocation5] sm:$0xf]
    %v362 = vld [vmem:[#allocation5 + $0x4] sm:$0xf]
    %v363 = vld [vmem:[#allocation5 + $0x8] sm:$0xf]
    %v364 = vld [vmem:[#allocation5 + $0xc] sm:$0xf]
    %v365 = vld [vmem:[#allocation5 + $0x10] sm:$0xf]
    %v366 = vld [vmem:[#allocation5 + $0x14] sm:$0xf]
    %v367 = vld [vmem:[#allocation5 + $0x18] sm:$0xf]
    %v368 = vld [vmem:[#allocation5 + $0x1c] sm:$0xf]
    %v369 = vld [vmem:[#allocation5 + $0x20] sm:$0xf]
    %v370 = vld [vmem:[#allocation5 + $0x24] sm:$0xf]
    %v371 = vld [vmem:[#allocation5 + $0x28] sm:$0xf]
    %v372 = vld [vmem:[#allocation5 + $0x2c] sm:$0xf]
    %v373 = vld [vmem:[#allocation5 + $0x30] sm:$0xf]
    %v374 = vld [vmem:[#allocation5 + $0x34] sm:$0xf]
    %v375 = vld [vmem:[#allocation5 + $0x38] sm:$0xf]
    %v376 = vld [vmem:[#allocation5 + $0x3c] sm:$0xf]
    %v377 = vld [vmem:[%s6] sm:$0x1]
    %v379 = vlaneseq
    %v380 = vshrl.u32 %v379, 7
    %v381 = vsub.s32 0, %v380
    %v382 = vrot.slane %v377, %v381
    %v400 = vunpack.c.l.b16 %v361
    %v401 = vunpack.c.l.b16 %v362
    %v402 = vunpack.c.l.b16 %v363
    %v403 = vunpack.c.l.b16 %v364
    %v404 = vunpack.c.l.b16 %v365
    %v405 = vunpack.c.l.b16 %v366
    %v406 = vunpack.c.l.b16 %v367
    %v407 = vunpack.c.l.b16 %v368
    %v408 = vunpack.c.l.b16 %v369
    %v409 = vunpack.c.l.b16 %v370
    %v410 = vunpack.c.l.b16 %v371
    %v411 = vunpack.c.l.b16 %v372
    %v412 = vunpack.c.l.b16 %v373
    %v413 = vunpack.c.l.b16 %v374
    %v414 = vunpack.c.l.b16 %v375
    %v415 = vunpack.c.l.b16 %v376
    %v416 = vpack.c.b16 %v401, %v400
    %v417 = vpack.c.b16 %v403, %v402
    %v418 = vpack.c.b16 %v405, %v404
    %v419 = vpack.c.b16 %v407, %v406
    %v420 = vpack.c.b16 %v409, %v408
    %v421 = vpack.c.b16 %v411, %v410
    %v422 = vpack.c.b16 %v413, %v412
    %v423 = vpack.c.b16 %v415, %v414
    %432 = vmatprep.subr.bf16.mxu0 0
    %433 = vmatpush1.bf16.msra.mxu0 %v423
    %434 = vmatprep.subr.bf16.mxu0 0
    %435 = vmatpush1.bf16.msra.mxu0 %v422
    %436 = vmatprep.subr.bf16.mxu0 0
    %437 = vmatpush1.bf16.msra.mxu0 %v421
    %438 = vmatprep.subr.bf16.mxu0 0
    %439 = vmatpush1.bf16.msra.mxu0 %v420
    %440 = vmatprep.subr.bf16.mxu0 0
    %441 = vmatpush1.bf16.msra.mxu0 %v419
    %442 = vmatprep.subr.bf16.mxu0 0
    %443 = vmatpush1.bf16.msra.mxu0 %v418
    %444 = vmatprep.subr.bf16.mxu0 0
    %445 = vmatpush1.bf16.msra.mxu0 %v417
    %446 = vmatprep.subr.bf16.mxu0 0
    %447 = vmatpush1.bf16.msra.mxu0 %v416
    %448 = vmatprep.subr.bf16.mxu0 0
    %449 = vmatpush2.bf16.msra.mxu0 0
    %450 = vmatprep.subr.bf16.mxu0 0
    %451 = vmatpush2.bf16.msra.mxu0 0
    %452 = vmatprep.subr.bf16.mxu0 0
    %453 = vmatpush2.bf16.msra.mxu0 0
    %454 = vmatprep.subr.bf16.mxu0 0
    %455 = vmatpush2.bf16.msra.mxu0 0
    %456 = vmatprep.subr.bf16.mxu0 0
    %457 = vmatpush2.bf16.msra.mxu0 0
    %458 = vmatprep.subr.bf16.mxu0 0
    %459 = vmatpush2.bf16.msra.mxu0 0
    %460 = vmatprep.subr.bf16.mxu0 0
    %461 = vmatpush2.bf16.msra.mxu0 0
    %462 = vmatprep.subr.bf16.mxu0 0
    %463 = vmatpush2.bf16.msra.mxu0 0
    %464 = vmatprep.mubr.bf16.mxu0 0
    %465 = vmatmul.mubr.bf16.gmra.mxu0 %v360
    %v466 = vpop.f32.mrf.mxu0
    %v467 = vadd.f32 %v382, %v466
    %v468 = vpop.f32.mrf.mxu0
    %v469 = vpop.f32.mrf.mxu0
    %v470 = vadd.f32 %v382, %v469
    %v471 = vpop.f32.mrf.mxu0
    %472 = vdwg.mxu0
    %v473 = vmax.f32 %v467, 0.0
    %v474 = vmax.f32 %v470, 0.0
    %v475 = vpack.c.bf16 %v474, %v473
    %v476 = vld [vmem:[#allocation7] sm:$0xf]
    %v477 = vld [vmem:[#allocation7 + $0x4] sm:$0xf]
    %v478 = vld [vmem:[#allocation7 + $0x8] sm:$0xf]
    %v479 = vld [vmem:[#allocation7 + $0xc] sm:$0xf]
    %v480 = vld [vmem:[#allocation7 + $0x10] sm:$0xf]
    %v481 = vld [vmem:[#allocation7 + $0x14] sm:$0xf]
    %v482 = vld [vmem:[#allocation7 + $0x18] sm:$0xf]
    %v483 = vld [vmem:[#allocation7 + $0x1c] sm:$0xf]
    %v484 = vld [vmem:[#allocation7 + $0x20] sm:$0xf]
    %v485 = vld [vmem:[#allocation7 + $0x24] sm:$0xf]
    %v486 = vld [vmem:[#allocation7 + $0x28] sm:$0xf]
    %v487 = vld [vmem:[#allocation7 + $0x2c] sm:$0xf]
    %v488 = vld [vmem:[#allocation7 + $0x30] sm:$0xf]
    %v489 = vld [vmem:[#allocation7 + $0x34] sm:$0xf]
    %v490 = vld [vmem:[#allocation7 + $0x38] sm:$0xf]
    %v491 = vld [vmem:[#allocation7 + $0x3c] sm:$0xf]
    %v492 = vld [vmem:[#allocation8] sm:$0x1]
    %v494 = vlaneseq
    %v495 = vshrl.u32 %v494, 7
    %v496 = vsub.s32 0, %v495
    %v497 = vrot.slane %v492, %v496
    %v515 = vunpack.c.l.b16 %v476
    %v516 = vunpack.c.l.b16 %v477
    %v517 = vunpack.c.l.b16 %v478
    %v518 = vunpack.c.l.b16 %v479
    %v519 = vunpack.c.l.b16 %v480
    %v520 = vunpack.c.l.b16 %v481
    %v521 = vunpack.c.l.b16 %v482
    %v522 = vunpack.c.l.b16 %v483
    %v523 = vunpack.c.l.b16 %v484
    %v524 = vunpack.c.l.b16 %v485
    %v525 = vunpack.c.l.b16 %v486
    %v526 = vunpack.c.l.b16 %v487
    %v527 = vunpack.c.l.b16 %v488
    %v528 = vunpack.c.l.b16 %v489
    %v529 = vunpack.c.l.b16 %v490
    %v530 = vunpack.c.l.b16 %v491
    %v531 = vpack.c.b16 %v516, %v515
    %v532 = vpack.c.b16 %v518, %v517
    %v533 = vpack.c.b16 %v520, %v519
    %v534 = vpack.c.b16 %v522, %v521
    %v535 = vpack.c.b16 %v524, %v523
    %v536 = vpack.c.b16 %v526, %v525
    %v537 = vpack.c.b16 %v528, %v527
    %v538 = vpack.c.b16 %v530, %v529
    %547 = vmatprep.subr.bf16.mxu0 0
    %548 = vmatpush1.bf16.msra.mxu0 %v538
    %549 = vmatprep.subr.bf16.mxu0 0
    %550 = vmatpush1.bf16.msra.mxu0 %v537
    %551 = vmatprep.subr.bf16.mxu0 0
    %552 = vmatpush1.bf16.msra.mxu0 %v536
    %553 = vmatprep.subr.bf16.mxu0 0
    %554 = vmatpush1.bf16.msra.mxu0 %v535
    %555 = vmatprep.subr.bf16.mxu0 0
    %556 = vmatpush1.bf16.msra.mxu0 %v534
    %557 = vmatprep.subr.bf16.mxu0 0
    %558 = vmatpush1.bf16.msra.mxu0 %v533
    %559 = vmatprep.subr.bf16.mxu0 0
    %560 = vmatpush1.bf16.msra.mxu0 %v532
    %561 = vmatprep.subr.bf16.mxu0 0
    %562 = vmatpush1.bf16.msra.mxu0 %v531
    %563 = vmatprep.subr.bf16.mxu0 0
    %564 = vmatpush2.bf16.msra.mxu0 0
    %565 = vmatprep.subr.bf16.mxu0 0
    %566 = vmatpush2.bf16.msra.mxu0 0
    %567 = vmatprep.subr.bf16.mxu0 0
    %568 = vmatpush2.bf16.msra.mxu0 0
    %569 = vmatprep.subr.bf16.mxu0 0
    %570 = vmatpush2.bf16.msra.mxu0 0
    %571 = vmatprep.subr.bf16.mxu0 0
    %572 = vmatpush2.bf16.msra.mxu0 0
    %573 = vmatprep.subr.bf16.mxu0 0
    %574 = vmatpush2.bf16.msra.mxu0 0
    %575 = vmatprep.subr.bf16.mxu0 0
    %576 = vmatpush2.bf16.msra.mxu0 0
    %577 = vmatprep.subr.bf16.mxu0 0
    %578 = vmatpush2.bf16.msra.mxu0 0
    %579 = vmatprep.mubr.bf16.mxu0 0
    %580 = vmatmul.mubr.bf16.gmra.mxu0 %v475
    %v581 = vpop.f32.mrf.mxu0
    %v582 = vadd.f32 %v497, %v581
    %v583 = vpop.f32.mrf.mxu0
    %v584 = vpop.f32.mrf.mxu0
    %v585 = vadd.f32 %v497, %v584
    %v586 = vpop.f32.mrf.mxu0
    %587 = vdwg.mxu0
    %v588 = vpack.c.bf16 %v585, %v582
    %v589 = vld [vmem:[#allocation10] sm:$0xf]
    %v590 = vld [vmem:[#allocation10 + $0x4] sm:$0xf]
    %v591 = vld [vmem:[#allocation10 + $0x8] sm:$0xf]
    %v592 = vld [vmem:[#allocation10 + $0xc] sm:$0xf]
    %v593 = vld [vmem:[#allocation10 + $0x10] sm:$0xf]
    %v594 = vld [vmem:[#allocation10 + $0x14] sm:$0xf]
    %v595 = vld [vmem:[#allocation10 + $0x18] sm:$0xf]
    %v596 = vld [vmem:[#allocation10 + $0x1c] sm:$0xf]
    %v597 = vld [vmem:[#allocation10 + $0x20] sm:$0xf]
    %v598 = vld [vmem:[#allocation10 + $0x24] sm:$0xf]
    %v599 = vld [vmem:[#allocation10 + $0x28] sm:$0xf]
    %v600 = vld [vmem:[#allocation10 + $0x2c] sm:$0xf]
    %v601 = vld [vmem:[#allocation10 + $0x30] sm:$0xf]
    %v602 = vld [vmem:[#allocation10 + $0x34] sm:$0xf]
    %v603 = vld [vmem:[#allocation10 + $0x38] sm:$0xf]
    %v604 = vld [vmem:[#allocation10 + $0x3c] sm:$0xf]
    %v605 = vld [vmem:[#allocation11] sm:$0x1]
    %v607 = vlaneseq
    %v608 = vshrl.u32 %v607, 7
    %v609 = vsub.s32 0, %v608
    %v610 = vrot.slane %v605, %v609
    %v628 = vunpack.c.l.b16 %v589
    %v629 = vunpack.c.l.b16 %v590
    %v630 = vunpack.c.l.b16 %v591
    %v631 = vunpack.c.l.b16 %v592
    %v632 = vunpack.c.l.b16 %v593
    %v633 = vunpack.c.l.b16 %v594
    %v634 = vunpack.c.l.b16 %v595
    %v635 = vunpack.c.l.b16 %v596
    %v636 = vunpack.c.l.b16 %v597
    %v637 = vunpack.c.l.b16 %v598
    %v638 = vunpack.c.l.b16 %v599
    %v639 = vunpack.c.l.b16 %v600
    %v640 = vunpack.c.l.b16 %v601
    %v641 = vunpack.c.l.b16 %v602
    %v642 = vunpack.c.l.b16 %v603
    %v643 = vunpack.c.l.b16 %v604
    %v644 = vpack.c.b16 %v629, %v628
    %v645 = vpack.c.b16 %v631, %v630
    %v646 = vpack.c.b16 %v633, %v632
    %v647 = vpack.c.b16 %v635, %v634
    %v648 = vpack.c.b16 %v637, %v636
    %v649 = vpack.c.b16 %v639, %v638
    %v650 = vpack.c.b16 %v641, %v640
    %v651 = vpack.c.b16 %v643, %v642
    %660 = vmatprep.subr.bf16.mxu0 0
    %661 = vmatpush1.bf16.msra.mxu0 %v651
    %662 = vmatprep.subr.bf16.mxu0 0
    %663 = vmatpush1.bf16.msra.mxu0 %v650
    %664 = vmatprep.subr.bf16.mxu0 0
    %665 = vmatpush1.bf16.msra.mxu0 %v649
    %666 = vmatprep.subr.bf16.mxu0 0
    %667 = vmatpush1.bf16.msra.mxu0 %v648
    %668 = vmatprep.subr.bf16.mxu0 0
    %669 = vmatpush1.bf16.msra.mxu0 %v647
    %670 = vmatprep.subr.bf16.mxu0 0
    %671 = vmatpush1.bf16.msra.mxu0 %v646
    %672 = vmatprep.subr.bf16.mxu0 0
    %673 = vmatpush1.bf16.msra.mxu0 %v645
    %674 = vmatprep.subr.bf16.mxu0 0
    %675 = vmatpush1.bf16.msra.mxu0 %v644
    %676 = vmatprep.subr.bf16.mxu0 0
    %677 = vmatpush2.bf16.msra.mxu0 0
    %678 = vmatprep.subr.bf16.mxu0 0
    %679 = vmatpush2.bf16.msra.mxu0 0
    %680 = vmatprep.subr.bf16.mxu0 0
    %681 = vmatpush2.bf16.msra.mxu0 0
    %682 = vmatprep.subr.bf16.mxu0 0
    %683 = vmatpush2.bf16.msra.mxu0 0
    %684 = vmatprep.subr.bf16.mxu0 0
    %685 = vmatpush2.bf16.msra.mxu0 0
    %686 = vmatprep.subr.bf16.mxu0 0
    %687 = vmatpush2.bf16.msra.mxu0 0
    %688 = vmatprep.subr.bf16.mxu0 0
    %689 = vmatpush2.bf16.msra.mxu0 0
    %690 = vmatprep.subr.bf16.mxu0 0
    %691 = vmatpush2.bf16.msra.mxu0 0
    %692 = vmatprep.mubr.bf16.mxu0 0
    %693 = vmatmul.mubr.bf16.gmra.mxu0 %v588
    %v694 = vpop.f32.mrf.mxu0
    %v695 = vadd.f32 %v610, %v694
    %v696 = vpop.f32.mrf.mxu0
    %v697 = vpop.f32.mrf.mxu0
    %v698 = vadd.f32 %v610, %v697
    %v699 = vpop.f32.mrf.mxu0
    %700 = vdwg.mxu0
    %v701 = vmax.f32 %v695, 0.0
    %v702 = vmax.f32 %v698, 0.0
    %v703 = vpack.c.bf16 %v702, %v701
    %v704 = vld [vmem:[#allocation13] sm:$0xf]
    %v705 = vld [vmem:[#allocation13 + $0x4] sm:$0xf]
    %v706 = vld [vmem:[#allocation13 + $0x8] sm:$0xf]
    %v707 = vld [vmem:[#allocation13 + $0xc] sm:$0xf]
    %v708 = vld [vmem:[#allocation13 + $0x10] sm:$0xf]
    %v709 = vld [vmem:[#allocation13 + $0x14] sm:$0xf]
    %v710 = vld [vmem:[#allocation13 + $0x18] sm:$0xf]
    %v711 = vld [vmem:[#allocation13 + $0x1c] sm:$0xf]
    %v712 = vld [vmem:[#allocation13 + $0x20] sm:$0xf]
    %v713 = vld [vmem:[#allocation13 + $0x24] sm:$0xf]
    %v714 = vld [vmem:[#allocation13 + $0x28] sm:$0xf]
    %v715 = vld [vmem:[#allocation13 + $0x2c] sm:$0xf]
    %v716 = vld [vmem:[#allocation13 + $0x30] sm:$0xf]
    %v717 = vld [vmem:[#allocation13 + $0x34] sm:$0xf]
    %v718 = vld [vmem:[#allocation13 + $0x38] sm:$0xf]
    %v719 = vld [vmem:[#allocation13 + $0x3c] sm:$0xf]
    %v720 = vld [vmem:[#allocation14] sm:$0x1]
    %v722 = vlaneseq
    %v723 = vshrl.u32 %v722, 7
    %v724 = vsub.s32 0, %v723
    %v725 = vrot.slane %v720, %v724
    %v743 = vunpack.c.l.b16 %v704
    %v744 = vunpack.c.l.b16 %v705
    %v745 = vunpack.c.l.b16 %v706
    %v746 = vunpack.c.l.b16 %v707
    %v747 = vunpack.c.l.b16 %v708
    %v748 = vunpack.c.l.b16 %v709
    %v749 = vunpack.c.l.b16 %v710
    %v750 = vunpack.c.l.b16 %v711
    %v751 = vunpack.c.l.b16 %v712
    %v752 = vunpack.c.l.b16 %v713
    %v753 = vunpack.c.l.b16 %v714
    %v754 = vunpack.c.l.b16 %v715
    %v755 = vunpack.c.l.b16 %v716
    %v756 = vunpack.c.l.b16 %v717
    %v757 = vunpack.c.l.b16 %v718
    %v758 = vunpack.c.l.b16 %v719
    %v759 = vpack.c.b16 %v744, %v743
    %v760 = vpack.c.b16 %v746, %v745
    %v761 = vpack.c.b16 %v748, %v747
    %v762 = vpack.c.b16 %v750, %v749
    %v763 = vpack.c.b16 %v752, %v751
    %v764 = vpack.c.b16 %v754, %v753
    %v765 = vpack.c.b16 %v756, %v755
    %v766 = vpack.c.b16 %v758, %v757
    %775 = vmatprep.subr.bf16.mxu0 0
    %776 = vmatpush1.bf16.msra.mxu0 %v766
    %777 = vmatprep.subr.bf16.mxu0 0
    %778 = vmatpush1.bf16.msra.mxu0 %v765
    %779 = vmatprep.subr.bf16.mxu0 0
    %780 = vmatpush1.bf16.msra.mxu0 %v764
    %781 = vmatprep.subr.bf16.mxu0 0
    %782 = vmatpush1.bf16.msra.mxu0 %v763
    %783 = vmatprep.subr.bf16.mxu0 0
    %784 = vmatpush1.bf16.msra.mxu0 %v762
    %785 = vmatprep.subr.bf16.mxu0 0
    %786 = vmatpush1.bf16.msra.mxu0 %v761
    %787 = vmatprep.subr.bf16.mxu0 0
    %788 = vmatpush1.bf16.msra.mxu0 %v760
    %789 = vmatprep.subr.bf16.mxu0 0
    %790 = vmatpush1.bf16.msra.mxu0 %v759
    %791 = vmatprep.subr.bf16.mxu0 0
    %792 = vmatpush2.bf16.msra.mxu0 0
    %793 = vmatprep.subr.bf16.mxu0 0
    %794 = vmatpush2.bf16.msra.mxu0 0
    %795 = vmatprep.subr.bf16.mxu0 0
    %796 = vmatpush2.bf16.msra.mxu0 0
    %797 = vmatprep.subr.bf16.mxu0 0
    %798 = vmatpush2.bf16.msra.mxu0 0
    %799 = vmatprep.subr.bf16.mxu0 0
    %800 = vmatpush2.bf16.msra.mxu0 0
    %801 = vmatprep.subr.bf16.mxu0 0
    %802 = vmatpush2.bf16.msra.mxu0 0
    %803 = vmatprep.subr.bf16.mxu0 0
    %804 = vmatpush2.bf16.msra.mxu0 0
    %805 = vmatprep.subr.bf16.mxu0 0
    %806 = vmatpush2.bf16.msra.mxu0 0
    %807 = vmatprep.mubr.bf16.mxu0 0
    %808 = vmatmul.mubr.bf16.gmra.mxu0 %v703
    %v809 = vpop.f32.mrf.mxu0
    %v810 = vadd.f32 %v725, %v809
    %v811 = vpop.f32.mrf.mxu0
    %v812 = vpop.f32.mrf.mxu0
    %v813 = vadd.f32 %v725, %v812
    %v814 = vpop.f32.mrf.mxu0
    %815 = vdwg.mxu0
    %v816 = vmax.f32 %v810, 0.0
    %v817 = vmax.f32 %v813, 0.0
    %v818 = vpack.c.bf16 %v817, %v816
    %v819 = vld [vmem:[#allocation16] sm:$0xf]
    %v820 = vld [vmem:[#allocation16 + $0x4] sm:$0xf]
    %v821 = vld [vmem:[#allocation16 + $0x8] sm:$0xf]
    %v822 = vld [vmem:[#allocation16 + $0xc] sm:$0xf]
    %v823 = vld [vmem:[#allocation16 + $0x10] sm:$0xf]
    %v824 = vld [vmem:[#allocation16 + $0x14] sm:$0xf]
    %v825 = vld [vmem:[#allocation16 + $0x18] sm:$0xf]
    %v826 = vld [vmem:[#allocation16 + $0x1c] sm:$0xf]
    %v827 = vld [vmem:[#allocation16 + $0x20] sm:$0xf]
    %v828 = vld [vmem:[#allocation16 + $0x24] sm:$0xf]
    %v829 = vld [vmem:[#allocation16 + $0x28] sm:$0xf]
    %v830 = vld [vmem:[#allocation16 + $0x2c] sm:$0xf]
    %v831 = vld [vmem:[#allocation16 + $0x30] sm:$0xf]
    %v832 = vld [vmem:[#allocation16 + $0x34] sm:$0xf]
    %v833 = vld [vmem:[#allocation16 + $0x38] sm:$0xf]
    %v834 = vld [vmem:[#allocation16 + $0x3c] sm:$0xf]
    %v835 = vld [vmem:[#allocation17] sm:$0x1]
    %v837 = vlaneseq
    %v838 = vshrl.u32 %v837, 7
    %v839 = vsub.s32 0, %v838
    %v840 = vrot.slane %v835, %v839
    %v858 = vunpack.c.l.b16 %v819
    %v859 = vunpack.c.l.b16 %v820
    %v860 = vunpack.c.l.b16 %v821
    %v861 = vunpack.c.l.b16 %v822
    %v862 = vunpack.c.l.b16 %v823
    %v863 = vunpack.c.l.b16 %v824
    %v864 = vunpack.c.l.b16 %v825
    %v865 = vunpack.c.l.b16 %v826
    %v866 = vunpack.c.l.b16 %v827
    %v867 = vunpack.c.l.b16 %v828
    %v868 = vunpack.c.l.b16 %v829
    %v869 = vunpack.c.l.b16 %v830
    %v870 = vunpack.c.l.b16 %v831
    %v871 = vunpack.c.l.b16 %v832
    %v872 = vunpack.c.l.b16 %v833
    %v873 = vunpack.c.l.b16 %v834
    %v874 = vpack.c.b16 %v859, %v858
    %v875 = vpack.c.b16 %v861, %v860
    %v876 = vpack.c.b16 %v863, %v862
    %v877 = vpack.c.b16 %v865, %v864
    %v878 = vpack.c.b16 %v867, %v866
    %v879 = vpack.c.b16 %v869, %v868
    %v880 = vpack.c.b16 %v871, %v870
    %v881 = vpack.c.b16 %v873, %v872
    %890 = vmatprep.subr.bf16.mxu0 0
    %891 = vmatpush1.bf16.msra.mxu0 %v881
    %892 = vmatprep.subr.bf16.mxu0 0
    %893 = vmatpush1.bf16.msra.mxu0 %v880
    %894 = vmatprep.subr.bf16.mxu0 0
    %895 = vmatpush1.bf16.msra.mxu0 %v879
    %896 = vmatprep.subr.bf16.mxu0 0
    %897 = vmatpush1.bf16.msra.mxu0 %v878
    %898 = vmatprep.subr.bf16.mxu0 0
    %899 = vmatpush1.bf16.msra.mxu0 %v877
    %900 = vmatprep.subr.bf16.mxu0 0
    %901 = vmatpush1.bf16.msra.mxu0 %v876
    %902 = vmatprep.subr.bf16.mxu0 0
    %903 = vmatpush1.bf16.msra.mxu0 %v875
    %904 = vmatprep.subr.bf16.mxu0 0
    %905 = vmatpush1.bf16.msra.mxu0 %v874
    %906 = vmatprep.subr.bf16.mxu0 0
    %907 = vmatpush2.bf16.msra.mxu0 0
    %908 = vmatprep.subr.bf16.mxu0 0
    %909 = vmatpush2.bf16.msra.mxu0 0
    %910 = vmatprep.subr.bf16.mxu0 0
    %911 = vmatpush2.bf16.msra.mxu0 0
    %912 = vmatprep.subr.bf16.mxu0 0
    %913 = vmatpush2.bf16.msra.mxu0 0
    %914 = vmatprep.subr.bf16.mxu0 0
    %915 = vmatpush2.bf16.msra.mxu0 0
    %916 = vmatprep.subr.bf16.mxu0 0
    %917 = vmatpush2.bf16.msra.mxu0 0
    %918 = vmatprep.subr.bf16.mxu0 0
    %919 = vmatpush2.bf16.msra.mxu0 0
    %920 = vmatprep.subr.bf16.mxu0 0
    %921 = vmatpush2.bf16.msra.mxu0 0
    %922 = vmatprep.mubr.bf16.mxu0 0
    %923 = vmatmul.mubr.bf16.gmra.mxu0 %v818
    %v924 = vpop.f32.mrf.mxu0
    %v925 = vadd.f32 %v840, %v924
    %v926 = vpop.f32.mrf.mxu0
    %v927 = vpop.f32.mrf.mxu0
    %v928 = vadd.f32 %v840, %v927
    %v929 = vpop.f32.mrf.mxu0
    %930 = vdwg.mxu0
    %v931 = vxor.u32 %v925, 2147483648
    %v932 = vxor.u32 %v928, 2147483648
    %v933 = vmul.f32 %v931, 1.442695
    %v934 = vpow.pop %v933
    %v935 = vmul.f32 %v932, 1.442695
    %v936 = vpow.pop %v935
    %v937 = vadd.f32 %v934, 1.0
    %v938 = vadd.f32 %v936, 1.0
    %v939 = vrcp.pop %v937
    %v940 = vmul.f32 1.0, %v939
    %v941 = vrcp.pop %v938
    %v942 = vmul.f32 1.0, %v941
    %943 = vst [vmem:[#allocation19] sm:$0xff] %v940
    %944 = vst [vmem:[#allocation19 + $0x8] sm:$0xff] %v942
    // Predicated region
    $region102: #{conv_autoencoder_forward.1} parent=1 // pred_check
      _
    $region103: #{conv_autoencoder_forward.1} parent=1 // pred_check_branch
      %946 = sbr.rel (0) target = $region105
    $region104: #{conv_autoencoder_forward.1} parent=1 // pred_region
      %s948 = ssub.s32 256, 256
      %949 = vsyncadd [#allocation4], %s948
      %s950 = sshll.u32 [#allocation19], 4
      %s951 = int_to_ptr.vmem [resolvable:$true] %s950
      %956 = dma.vmem_to_hbm [thread:$0]  %s951, 256, %s15, [#allocation4], 128, 128, 8
    $region105: #{conv_autoencoder_forward.1} parent=1 // pred_fallthru
      _
    // Predicated region
    $region106: #{conv_autoencoder_forward.1} parent=1 // pred_check
      _
    $region107: #{conv_autoencoder_forward.1} parent=1 // pred_check_branch
      %958 = sbr.rel (0) target = $region109
    $region108: #{conv_autoencoder_forward.1} parent=1 // pred_region
      %959 = dma.done [#allocation4], 256
    $region109: #{conv_autoencoder_forward.1} parent=1 // pred_fallthru
      _
    %960 = vsyncpa [#allocation3], 1
    %961 = vsyncpa [#allocation6], 1
    %962 = vsyncpa [#allocation9], 1
    %963 = vsyncpa [#allocation12], 1
    %964 = vsyncpa [#allocation15], 1
    %965 = vsyncpa [#allocation18], 1
    %966 = vsyncpa [#allocation4], 1

</llo_original>
